<compile_context>
chip_gen: v5e
topology: v5e:2x2
jax: 0.10.0
libtpu: 0.0.40
codegen_flags: <defaults>
</compile_context>

<pallas_src>
import functools

import jax
import jax.numpy as jnp
from jax.experimental import pallas as pl
from jax.experimental.pallas import tpu as pltpu


def _make_js_kernel(num_rows: int, tile_rows: int):
    inv_n = 1.0 / float(num_rows)

    def js_kernel(y_ref, x_ref, o_ref, acc_ref):
        step = pl.program_id(0)

        @pl.when(step == 0)
        def _():
            acc_ref[...] = jnp.zeros_like(acc_ref)

        y = y_ref[...].astype(jnp.float32)
        x = x_ref[...].astype(jnp.float32)

        # Mask padded rows of the last tile (when num_rows % tile_rows != 0).
        row = step * tile_rows + jax.lax.broadcasted_iota(
            jnp.int32, (tile_rows, 1), 0
        )
        valid = row < num_rows
        y = jnp.where(valid, y, 0.0)
        x = jnp.where(valid, x, 0.0)

        # Numerically stable softmax / log_softmax along C, reusing exp(shift)
        # (2 exps per element instead of 4; per-row log + reciprocal are tiny).
        y_shift = y - jnp.max(y, axis=1, keepdims=True)
        e_y = jnp.exp(y_shift)
        s_y = jnp.sum(e_y, axis=1, keepdims=True)
        log_sy = y_shift - jnp.log(s_y)
        sy = e_y * pl.reciprocal(s_y)

        x_shift = x - jnp.max(x, axis=1, keepdims=True)
        e_x = jnp.exp(x_shift)
        s_x = jnp.sum(e_x, axis=1, keepdims=True)
        log_sx = x_shift - jnp.log(s_x)
        sx = e_x * pl.reciprocal(s_x)

        # sy*log_sx - sy*log_sy + sx*log_sy - sx*log_sx
        #   == (sy - sx) * (log_sx - log_sy)
        b = (sy - sx) * (log_sx - log_sy)
        b = jnp.where(valid, b, 0.0)

        acc_ref[...] += jnp.sum(b, keepdims=True)

        @pl.when(step == pl.num_programs(0) - 1)
        def _():
            o_ref[...] = acc_ref[...] * jnp.float32(-0.5 * inv_n)

    return js_kernel


@functools.partial(jax.jit, static_argnames=("tm",))
def jensen_shannon(y: jax.Array, x: jax.Array, tm: int = 512) -> jax.Array:
    """Pallas TPU implementation of the Jensen_Shannon module forward.

    y, x: (N, C) arrays (any float dtype; upcast to f32 inside the kernel);
    returns a scalar (float32).
    """
    assert y.shape == x.shape and y.ndim == 2
    N, C = y.shape

    # Sublane granularity: 8 rows for 32-bit dtypes, 16 for 16-bit (bf16).
    sub = 16 if jnp.dtype(y.dtype).itemsize < 4 else 8
    if tm >= N:
        tm = N  # single full-extent block along rows (always legal)
    else:
        tm = max(sub, (tm // sub) * sub)

    grid = (pl.cdiv(N, tm),)

    out = pl.pallas_call(
        _make_js_kernel(N, tm),
        out_shape=jax.ShapeDtypeStruct((1, 1), jnp.float32),
        grid_spec=pltpu.PrefetchScalarGridSpec(
            num_scalar_prefetch=0,
            grid=grid,
            in_specs=[
                pl.BlockSpec((tm, C), lambda i: (i, 0)),
                pl.BlockSpec((tm, C), lambda i: (i, 0)),
            ],
            out_specs=pl.BlockSpec((1, 1), lambda i: (0, 0)),
            scratch_shapes=[pltpu.VMEM((1, 1), jnp.float32)],
        ),
        compiler_params=pltpu.CompilerParams(
            dimension_semantics=("arbitrary",),
            vmem_limit_bytes=64 * 1024 * 1024,
        ),
    )(y, x)
    return out[0, 0]


def _reference(y, x):
    # pure-JAX reference mirroring the PyTorch code exactly
    num_data = x.shape[0]
    sy = jax.nn.softmax(y, axis=1)
    sx = jax.nn.softmax(x, axis=1)
    lsy = jax.nn.log_softmax(y, axis=1)
    lsx = jax.nn.log_softmax(x, axis=1)
    b = sy * lsx - sy * lsy
    b = b + (sx * lsy - sx * lsx)
    b = -0.5 * jnp.sum(b)
    return b / num_data


if __name__ == "__main__":
    key = jax.random.PRNGKey(0)
    ky, kx = jax.random.split(key)
    # Small shapes: N=20 rows, C=128 classes.  tm=8 -> 3 grid steps, last tile
    # partially masked, exercising init / accumulate / finalize and row masking.
    N, C = 20, 128
    y = jax.random.normal(ky, (N, C), dtype=jnp.float32)
    x = jax.random.normal(kx, (N, C), dtype=jnp.float32)

    out = jensen_shannon(y, x, tm=8)
    out = jax.block_until_ready(out)

    ref = jax.block_until_ready(_reference(y, x))
    assert jnp.allclose(out, ref, atol=1e-5, rtol=1e-5), (out, ref)

    print("KERNEL_OK")
</pallas_src>

<mosaic_0001>
module attributes {stable_mosaic.version = 11 : i64} {
  func.func @js_kernel(%arg0: i32, %arg1: memref<8x128xf32, #tpu.memory_space<vmem>>, %arg2: memref<8x128xf32, #tpu.memory_space<vmem>>, %arg3: memref<1x1xf32, #tpu.memory_space<vmem>>, %arg4: memref<1x1xf32, #tpu.memory_space<vmem>>) attributes {dimension_semantics = [#tpu.dimension_semantics<arbitrary>], iteration_bounds = array<i64: 3>, scalar_prefetch = 0 : i64, scratch_operands = 1 : i64, tpu.core_type = #tpu.core_type<tc>, window_params = [{transform_indices = @transform_0, window_bounds = array<i64: 8, 128>}, {transform_indices = @transform_1, window_bounds = array<i64: 8, 128>}, {pipeline_mode = #tpu.pipeline_mode<synchronous>, transform_indices = @transform_2, window_bounds = array<i64: 1, 1>}]} {
    %c0_i32 = arith.constant 0 : i32
    %0 = arith.cmpi eq, %arg0, %c0_i32 : i32
    %1 = arith.extui %0 : i1 to i32
    %c0_i32_0 = arith.constant 0 : i32
    %2 = arith.cmpi ne, %1, %c0_i32_0 : i32
    scf.if %2 {
      %cst_16 = arith.constant 0.000000e+00 : f32
      %63 = vector.broadcast %cst_16 : f32 to vector<1x1xf32>
      %c0_17 = arith.constant 0 : index
      %c0_18 = arith.constant 0 : index
      %64 = vector.load %arg4[%c0_17, %c0_18] : memref<1x1xf32, #tpu.memory_space<vmem>>, vector<1x1xf32>
      tpu.vector_store %arg4[%c0_17, %c0_18], %63 {strides = array<i32>} : memref<1x1xf32, #tpu.memory_space<vmem>>, vector<1x1xf32>,
    } else {
    }
    %c0 = arith.constant 0 : index
    %c0_1 = arith.constant 0 : index
    %3 = vector.load %arg1[%c0, %c0_1] : memref<8x128xf32, #tpu.memory_space<vmem>>, vector<8x128xf32>
    %c0_2 = arith.constant 0 : index
    %c0_3 = arith.constant 0 : index
    %4 = vector.load %arg2[%c0_2, %c0_3] : memref<8x128xf32, #tpu.memory_space<vmem>>, vector<8x128xf32>
    %c8_i32 = arith.constant 8 : i32
    %5 = arith.muli %arg0, %c8_i32 : i32
    %6 = tpu.iota {dimensions = array<i32: 0>} : vector<8x1xi32>
    %7 = vector.broadcast %5 : i32 to vector<8x1xi32>
    %8 = arith.addi %7, %6 : vector<8x1xi32>
    %c20_i32 = arith.constant 20 : i32
    %9 = vector.broadcast %c20_i32 : i32 to vector<8x1xi32>
    %10 = arith.cmpi slt, %8, %9 : vector<8x1xi32>
    %cst = arith.constant 0.000000e+00 : f32
    %11 = vector.shape_cast %10 : vector<8x1xi1> to vector<8x1xi1>
    %12 = vector.broadcast %11 : vector<8x1xi1> to vector<8x128xi1>
    %13 = vector.broadcast %cst : f32 to vector<8x128xf32>
    %14 = arith.select %12, %3, %13 : vector<8x128xi1>, vector<8x128xf32>
    %cst_4 = arith.constant 0.000000e+00 : f32
    %15 = vector.shape_cast %10 : vector<8x1xi1> to vector<8x1xi1>
    %16 = vector.broadcast %15 : vector<8x1xi1> to vector<8x128xi1>
    %17 = vector.broadcast %cst_4 : f32 to vector<8x128xf32>
    %18 = arith.select %16, %4, %17 : vector<8x128xi1>, vector<8x128xf32>
    %cst_5 = arith.constant dense<0xFF800000> : vector<8xf32>
    %19 = vector.multi_reduction <maximumf>, %14, %cst_5 [1] : vector<8x128xf32> to vector<8xf32>
    %20 = vector.shape_cast %19 : vector<8xf32> to vector<8x1xf32>
    %21 = vector.broadcast %20 : vector<8x1xf32> to vector<8x128xf32>
    %22 = arith.subf %14, %21 : vector<8x128xf32>
    %23 = math.exp %22 : vector<8x128xf32>
    %cst_6 = arith.constant dense<0.000000e+00> : vector<8xf32>
    %24 = vector.multi_reduction <add>, %23, %cst_6 [1] : vector<8x128xf32> to vector<8xf32>
    %25 = vector.shape_cast %24 : vector<8xf32> to vector<8x1xf32>
    %26 = math.log %25 : vector<8x1xf32>
    %27 = vector.broadcast %26 : vector<8x1xf32> to vector<8x128xf32>
    %28 = arith.subf %22, %27 : vector<8x128xf32>
    %29 = tpu.reciprocal %25 : vector<8x1xf32> -> vector<8x1xf32>
    %30 = vector.broadcast %29 : vector<8x1xf32> to vector<8x128xf32>
    %31 = arith.mulf %23, %30 : vector<8x128xf32>
    %cst_7 = arith.constant dense<0xFF800000> : vector<8xf32>
    %32 = vector.multi_reduction <maximumf>, %18, %cst_7 [1] : vector<8x128xf32> to vector<8xf32>
    %33 = vector.shape_cast %32 : vector<8xf32> to vector<8x1xf32>
    %34 = vector.broadcast %33 : vector<8x1xf32> to vector<8x128xf32>
    %35 = arith.subf %18, %34 : vector<8x128xf32>
    %36 = math.exp %35 : vector<8x128xf32>
    %cst_8 = arith.constant dense<0.000000e+00> : vector<8xf32>
    %37 = vector.multi_reduction <add>, %36, %cst_8 [1] : vector<8x128xf32> to vector<8xf32>
    %38 = vector.shape_cast %37 : vector<8xf32> to vector<8x1xf32>
    %39 = math.log %38 : vector<8x1xf32>
    %40 = vector.broadcast %39 : vector<8x1xf32> to vector<8x128xf32>
    %41 = arith.subf %35, %40 : vector<8x128xf32>
    %42 = tpu.reciprocal %38 : vector<8x1xf32> -> vector<8x1xf32>
    %43 = vector.broadcast %42 : vector<8x1xf32> to vector<8x128xf32>
    %44 = arith.mulf %36, %43 : vector<8x128xf32>
    %45 = arith.subf %31, %44 : vector<8x128xf32>
    %46 = arith.subf %41, %28 : vector<8x128xf32>
    %47 = arith.mulf %45, %46 : vector<8x128xf32>
    %cst_9 = arith.constant 0.000000e+00 : f32
    %48 = vector.shape_cast %10 : vector<8x1xi1> to vector<8x1xi1>
    %49 = vector.broadcast %48 : vector<8x1xi1> to vector<8x128xi1>
    %50 = vector.broadcast %cst_9 : f32 to vector<8x128xf32>
    %51 = arith.select %49, %47, %50 : vector<8x128xi1>, vector<8x128xf32>
    %c0_10 = arith.constant 0 : index
    %c0_11 = arith.constant 0 : index
    %52 = vector.load %arg4[%c0_10, %c0_11] : memref<1x1xf32, #tpu.memory_space<vmem>>, vector<1x1xf32>
    %53 = vector.shape_cast %51 : vector<8x128xf32> to vector<1x8x128xf32>
    %cst_12 = arith.constant dense<0.000000e+00> : vector<1xf32>
    %54 = vector.multi_reduction <add>, %53, %cst_12 [1, 2] : vector<1x8x128xf32> to vector<1xf32>
    %55 = vector.shape_cast %54 : vector<1xf32> to vector<1x1x1xf32>
    %56 = vector.extract %55[0, 0, 0] : f32 from vector<1x1x1xf32>
    %57 = vector.broadcast %56 : f32 to vector<1x1xf32>
    %58 = arith.addf %52, %57 : vector<1x1xf32>
    %c0_13 = arith.constant 0 : index
    %c0_14 = arith.constant 0 : index
    %59 = vector.load %arg4[%c0_13, %c0_14] : memref<1x1xf32, #tpu.memory_space<vmem>>, vector<1x1xf32>
    tpu.vector_store %arg4[%c0_13, %c0_14], %58 {strides = array<i32>} : memref<1x1xf32, #tpu.memory_space<vmem>>, vector<1x1xf32>,
    %c2_i32 = arith.constant 2 : i32
    %60 = arith.cmpi eq, %arg0, %c2_i32 : i32
    %61 = arith.extui %60 : i1 to i32
    %c0_i32_15 = arith.constant 0 : i32
    %62 = arith.cmpi ne, %61, %c0_i32_15 : i32
    scf.if %62 {
      %c0_16 = arith.constant 0 : index
      %c0_17 = arith.constant 0 : index
      %63 = vector.load %arg4[%c0_16, %c0_17] : memref<1x1xf32, #tpu.memory_space<vmem>>, vector<1x1xf32>
      %cst_18 = arith.constant -2.500000e-02 : f32
      %64 = vector.broadcast %cst_18 : f32 to vector<1x1xf32>
      %65 = arith.mulf %63, %64 : vector<1x1xf32>
      %c0_19 = arith.constant 0 : index
      %c0_20 = arith.constant 0 : index
      %66 = vector.load %arg3[%c0_19, %c0_20] : memref<1x1xf32, #tpu.memory_space<vmem>>, vector<1x1xf32>
      tpu.vector_store %arg3[%c0_19, %c0_20], %65 {strides = array<i32>} : memref<1x1xf32, #tpu.memory_space<vmem>>, vector<1x1xf32>,
    } else {
    }
    return
  }
  func.func @transform_0(%arg0: i32) -> (i32, i32) {
    %c0_i32 = arith.constant 0 : i32
    %c0_i32_0 = arith.constant 0 : i32
    return %arg0, %c0_i32 : i32, i32
  }
  func.func @transform_1(%arg0: i32) -> (i32, i32) {
    %c0_i32 = arith.constant 0 : i32
    %c0_i32_0 = arith.constant 0 : i32
    return %arg0, %c0_i32 : i32, i32
  }
  func.func @transform_2(%arg0: i32) -> (i32, i32) {
    %c0_i32 = arith.constant 0 : i32
    %c0_i32_0 = arith.constant 0 : i32
    %c0_i32_1 = arith.constant 0 : i32
    return %c0_i32, %c0_i32_0 : i32, i32
  }
}

</mosaic_0001>

<llo_original>
// kernel: jensen_shannon.1
$region0: #{jensen_shannon.1}
  #allocation0 [shape = 'u32[]', space=smem, size = 0x4, offset = 0x4, fixed_abs, tag = 'smem constant byte address 0x4 - core index']
  #allocation1 [shape = 'u32[72,128]{1,0:T(1,128)}', space=vmem, size = 0x9000, scoped, tag = 'internal scratch']
  #allocation2 [shape = 'f32[1,1]{1,0:T(1,128)}', space=vmem, size = 0x200, scoped, tag = 'scratch operand']
  %s0 = inlined_call_operand.hbm [shape: f32[20,128], index: 0, kind: input, shape index: {}]
  %s1 = inlined_call_operand.hbm [shape: f32[20,128], index: 1, kind: input, shape index: {}]
  %s2 = inlined_call_operand.hbm [shape: f32[1,1], index: 2, kind: output, shape index: {}]
  %s3 = sld [smem:[#allocation0]]
  $region57: #{jensen_shannon.1} parent=0
    _
  %s5 = ssub.s32 1, %s3
  %s6 = scalar_select 0, %s5, %s3
  $region1: #{jensen_shannon.1} parent=0
    #allocation3 [shape = 'u8[8192]{0}', space=vmem, size = 0x2000, scoped, tag = 'input window, operand 0']
    #allocation4 [shape = 's32[2]{0}', space=sflag, size = 0x8, scoped, tag = 'scoped memory for jensen_shannon.1']
    #allocation5 [shape = 's32[2]{0}', space=sflag, size = 0x8, scoped, tag = 'scoped memory for jensen_shannon.1']
    #allocation6 [shape = 'u8[8192]{0}', space=vmem, size = 0x2000, scoped, tag = 'input window, operand 1']
    #allocation7 [shape = 's32[2]{0}', space=sflag, size = 0x8, scoped, tag = 'scoped memory for jensen_shannon.1']
    #allocation8 [shape = 'u8[512]{0}', space=vmem, size = 0x400, scoped, tag = 'output window, operand 0, single buffered']
    %7 = vsyncpa [#allocation4], 0
    %s8 = scalar_lea.sflag [#allocation4], 1
    %9 = vsyncpa %s8, 0
    %10 = vsyncpa [#allocation7], 0
    %s11 = scalar_lea.sflag [#allocation7], 1
    %12 = vsyncpa %s11, 0
    %13 = vsyncpa [#allocation5], 0
    loop: start=0, step=1, limit=5
    $region2: #{jensen_shannon.1} parent=1 // loop_pre_header
      _
    $region3: #{jensen_shannon.1} parent=1 // loop_header
      %s15 = sphi 0, %s19
      %p16 = scmp.ge.s32.totalorder %s15, 5
      %s25 = sphi 0, %s27
      %s28 = sphi 0, %s25
      %s29 = sphi 0, %s28
      %s45 = sphi 0, %s29
      %s51 = sphi 0, %s53
      %s54 = sphi 0, %s51
      %s55 = sphi 0, %s54
      %s71 = sphi 0, %s55
      %s75 = sphi 0, %s75
      %s77 = sphi 0, %s75
      %s78 = sphi 0, %s77
      %s92 = sphi 0, %s78
    $region4: #{jensen_shannon.1} parent=1 // loop_header_branch
      %18 = sbr.rel (%p16) target = $region8
    $region5: #{jensen_shannon.1} parent=1 // loop_body
      %s20 = ssub.s32 %s15, 1
      %s21 = ssub.s32 %s15, 2
      %s22 = sadd.s32 %s15, 1
      %s23 = ssub.s32 %s15, %s22
      %p24 = scmp.eq.s32.totalorder %s23, 0
      %s26 = sadd.s32 %s25, 1
      %s27 = scalar_select %p24, %s25, %s26
      %p30 = pneg %p24
      %p31 = scmp.eq.s32.totalorder %s15, 2
      %p32 = por %p30, %p31
      %p33 = scmp.ne.s32.totalorder %s25, %s28
      %p34 = scmp.eq.s32.totalorder %s15, 0
      %p35 = por %p33, %p34
      %p36 = scmp.ne.s32.totalorder %s25, %s28
      %p37 = scmp.eq.s32.totalorder %s20, 2
      %p38 = por %p36, %p37
      %p39 = scmp.ne.s32.totalorder %s28, %s29
      %p40 = scmp.eq.s32.totalorder %s20, 0
      %p41 = por %p39, %p40
      %p42 = scmp.ne.s32.totalorder %s28, %s29
      %p43 = scmp.eq.s32.totalorder %s21, 2
      %p44 = por %p42, %p43
      %p46 = scmp.ne.s32.totalorder %s29, %s45
      %p47 = scmp.eq.s32.totalorder %s21, 0
      %p48 = por %p46, %p47
      %s49 = ssub.s32 %s15, %s22
      %p50 = scmp.eq.s32.totalorder %s49, 0
      %s52 = sadd.s32 %s51, 1
      %s53 = scalar_select %p50, %s51, %s52
      %p56 = pneg %p50
      %p57 = scmp.eq.s32.totalorder %s15, 2
      %p58 = por %p56, %p57
      %p59 = scmp.ne.s32.totalorder %s51, %s54
      %p60 = scmp.eq.s32.totalorder %s15, 0
      %p61 = por %p59, %p60
      %p62 = scmp.ne.s32.totalorder %s51, %s54
      %p63 = scmp.eq.s32.totalorder %s20, 2
      %p64 = por %p62, %p63
      %p65 = scmp.ne.s32.totalorder %s54, %s55
      %p66 = scmp.eq.s32.totalorder %s20, 0
      %p67 = por %p65, %p66
      %p68 = scmp.ne.s32.totalorder %s54, %s55
      %p69 = scmp.eq.s32.totalorder %s21, 2
      %p70 = por %p68, %p69
      %p72 = scmp.ne.s32.totalorder %s55, %s71
      %p73 = scmp.eq.s32.totalorder %s21, 0
      %p74 = por %p72, %p73
      %s76 = sadd.s32 %s75, 1
      %p79 = scmp.eq.s32.totalorder %s15, 2
      %p80 = scmp.ne.s32.totalorder %s75, %s77
      %p81 = scmp.eq.s32.totalorder %s15, 0
      %p82 = por %p80, %p81
      %p83 = scmp.ne.s32.totalorder %s75, %s77
      %p84 = scmp.eq.s32.totalorder %s20, 2
      %p85 = por %p83, %p84
      %p86 = scmp.ne.s32.totalorder %s77, %s78
      %p87 = scmp.eq.s32.totalorder %s20, 0
      %p88 = por %p86, %p87
      %p89 = scmp.ne.s32.totalorder %s77, %s78
      %p90 = scmp.eq.s32.totalorder %s21, 2
      %p91 = por %p89, %p90
      %p93 = scmp.ne.s32.totalorder %s78, %s92
      %p94 = scmp.eq.s32.totalorder %s21, 0
      %p95 = por %p93, %p94
      %p96 = scmp.le.s32.totalorder 1, %s15
      %p97 = scmp.lt.s32.totalorder %s15, 4
      %p98 = pnand %p96, %p97
      %p99 = pneg %p98
      // Predicated region
      $region9: #{jensen_shannon.1} parent=5 // pred_check
        _
      $region10: #{jensen_shannon.1} parent=5 // pred_check_branch
        %101 = sbr.rel (%p98) target = $region12
      $region11: #{jensen_shannon.1} parent=5 // pred_region
        %s102 = ssub.s32 %s15, 1
      $region12: #{jensen_shannon.1} parent=5 // pred_fallthru
        _
      %p103 = scmp.lt.s32.totalorder %s15, 3
      // Predicated region
      $region13: #{jensen_shannon.1} parent=5 // pred_check
        %p104 = pneg %p103
      $region14: #{jensen_shannon.1} parent=5 // pred_check_branch
        %106 = sbr.rel (%p104) target = $region16
      $region15: #{jensen_shannon.1} parent=5 // pred_region
        // Predicated region
        $region17: #{jensen_shannon.1} parent=15 // pred_check
          %p107 = pneg %p35
        $region18: #{jensen_shannon.1} parent=15 // pred_check_branch
          %109 = sbr.rel (%p107) target = $region20
        $region19: #{jensen_shannon.1} parent=15 // pred_region
          %s110 = sand.u32 %s25, 1
          %s111 = scalar_lea.sflag [#allocation4], %s110
          %s112 = sand.u32 %s25, 1
          %s113 = smul.addr %s112, 8
          %s114 = scalar_lea.vmem [#allocation3], %s113
          %116 = vsyncadd %s111, 0
          %s117 = smul.addr %s15, 8
          %s118 = scalar_lea.hbm %s0, %s117
          %s120 = sshll.u32 %s118, 4
          %s121 = int_to_ptr.hbm [resolvable:$true] %s120
          %s122 = sshll.u32 %s114, 4
          %s123 = int_to_ptr.vmem [resolvable:$true] %s122
          %125 = dma.hbm_to_vmem [thread:$0]  %s121, 128, %s123, %s111
        $region20: #{jensen_shannon.1} parent=15 // pred_fallthru
          _
        // Predicated region
        $region21: #{jensen_shannon.1} parent=15 // pred_check
          %p126 = pneg %p61
        $region22: #{jensen_shannon.1} parent=15 // pred_check_branch
          %128 = sbr.rel (%p126) target = $region24
        $region23: #{jensen_shannon.1} parent=15 // pred_region
          %s129 = sand.u32 %s51, 1
          %s130 = scalar_lea.sflag [#allocation7], %s129
          %s131 = sand.u32 %s51, 1
          %s132 = smul.addr %s131, 8
          %s133 = scalar_lea.vmem [#allocation6], %s132
          %135 = vsyncadd %s130, 0
          %s136 = smul.addr %s15, 8
          %s137 = scalar_lea.hbm %s1, %s136
          %s139 = sshll.u32 %s137, 4
          %s140 = int_to_ptr.hbm [resolvable:$true] %s139
          %s141 = sshll.u32 %s133, 4
          %s142 = int_to_ptr.vmem [resolvable:$true] %s141
          %144 = dma.hbm_to_vmem [thread:$0]  %s140, 128, %s142, %s130
        $region24: #{jensen_shannon.1} parent=15 // pred_fallthru
          _
      $region16: #{jensen_shannon.1} parent=5 // pred_fallthru
        _
      %p145 = scmp.le.s32.totalorder 1, %s15
      %p146 = scmp.lt.s32.totalorder %s15, 4
      %p147 = pnand %p145, %p146
      %p148 = pneg %p147
      // Predicated region
      $region25: #{jensen_shannon.1} parent=5 // pred_check
        _
      $region26: #{jensen_shannon.1} parent=5 // pred_check_branch
        %150 = sbr.rel (%p147) target = $region28
      $region27: #{jensen_shannon.1} parent=5 // pred_region
        %s151 = ssub.s32 %s15, 1
        %s152 = sand.u32 %s28, 1
        %s153 = scalar_lea.sflag [#allocation4], %s152
        %s154 = sand.u32 %s28, 1
        %s155 = smul.addr %s154, 8
        %s156 = scalar_lea.vmem [#allocation3], %s155
        // Predicated region
        $region29: #{jensen_shannon.1} parent=27 // pred_check
          %p157 = pneg %p41
        $region30: #{jensen_shannon.1} parent=27 // pred_check_branch
          %159 = sbr.rel (%p157) target = $region32
        $region31: #{jensen_shannon.1} parent=27 // pred_region
          %161 = dma.done %s153, 128
        $region32: #{jensen_shannon.1} parent=27 // pred_fallthru
          _
        %s162 = sand.u32 %s54, 1
        %s163 = scalar_lea.sflag [#allocation7], %s162
        %s164 = sand.u32 %s54, 1
        %s165 = smul.addr %s164, 8
        %s166 = scalar_lea.vmem [#allocation6], %s165
        // Predicated region
        $region33: #{jensen_shannon.1} parent=27 // pred_check
          %p167 = pneg %p67
        $region34: #{jensen_shannon.1} parent=27 // pred_check_branch
          %169 = sbr.rel (%p167) target = $region36
        $region35: #{jensen_shannon.1} parent=27 // pred_region
          %171 = dma.done %s163, 128
        $region36: #{jensen_shannon.1} parent=27 // pred_fallthru
          _
        %s172 = sand.u32 %s28, 1
        %s173 = scalar_lea.sflag [#allocation4], %s172
        %s174 = sand.u32 %s28, 1
        %s175 = smul.addr %s174, 8
        %s176 = scalar_lea.vmem [#allocation3], %s175
        %p177 = pneg %p41
        %p178 = pneg %p38
        %s179 = sand.u32 %s54, 1
        %s180 = scalar_lea.sflag [#allocation7], %s179
        %s181 = sand.u32 %s54, 1
        %s182 = smul.addr %s181, 8
        %s183 = scalar_lea.vmem [#allocation6], %s182
        %p184 = pneg %p67
        %p185 = pneg %p64
        %p186 = pneg %p88
        %p187 = pneg %p85
        %p188 = scmp.eq.s32.totalorder %s20, 0
        // Predicated region
        $region37: #{jensen_shannon.1} parent=27 // pred_check
          %p189 = pneg %p188
        $region38: #{jensen_shannon.1} parent=27 // pred_check_branch
          %191 = sbr.rel (%p189) target = $region40
        $region39: #{jensen_shannon.1} parent=27 // pred_region
          %vm192 = vcmask 0
          %193 = vst.msk [vmem:[#allocation2] sm:$0x1] %vm192, 0.0
        $region40: #{jensen_shannon.1} parent=27 // pred_fallthru
          _
        %v194 = vld [vmem:[%s156] sm:$0xff]
        %v195 = vld [vmem:[%s166] sm:$0xff]
        %s196 = smul.u32 %s20, 8
        %v197 = vlaneseq
        %v198 = vshrl.u32 %v197, 7
        %v199 = vstv %s196
        %v200 = vadd.s32 %v199, %v198
        %vm201 = vcmp.lt.s32.totalorder %v200, 20
        %v202 = vsel %vm201, 1, 0
        %vm203 = vcmp.eq.s32.totalorder %v202, 1
        %v204 = vsel %vm203, %v194, 0.0
        %v205 = vsel %vm203, %v195, 0.0
        %206 = vmax.xlane.f32.xlu0 %v204
        %v207 = vpop.xlane.xlu0 %206
        %v208 = vsub.f32 %v204, %v207
        %v209 = vmul.f32 %v208, 1.442695
        %v210 = vpow.pop %v209
        %211 = vadd.xlane.f32.xlu0 %v210
        %v212 = vpop.xlane.xlu0 %211
        %v213 = vlog2.pop %v212
        %v214 = vmul.f32 %v213, 0.6931472
        %v215 = vsub.f32 %v208, %v214
        %v216 = vrcp.pop %v212
        %v217 = vmul.f32 %v212, %v216
        %v218 = vsub.f32 1.0, %v217
        %v219 = vmul.f32 %v216, %v218
        %v220 = vadd.f32 %v216, %v219
        %vm221 = vweird.f32 %v212
        %vm222 = vweird.f32 %v216
        %vm223 = vmor %vm221, %vm222
        %v224 = vsel %vm223, %v216, %v220
        %v225 = vand.u32 2147483647, %v212
        %vm226 = vcmp.eq.f32.partialorder %v225, 8.507059e+37
        %v227 = vand.u32 %v212, 2147483648
        %v228 = vor.u32 1.1754944e-38, %v227
        %v229 = vsel %vm226, %v228, %v224
        %v230 = vmul.f32 %v210, %v229
        %231 = vmax.xlane.f32.xlu0 %v205
        %v232 = vpop.xlane.xlu0 %231
        %v233 = vsub.f32 %v205, %v232
        %v234 = vmul.f32 %v233, 1.442695
        %v235 = vpow.pop %v234
        %236 = vadd.xlane.f32.xlu0 %v235
        %v237 = vpop.xlane.xlu0 %236
        %v238 = vlog2.pop %v237
        %v239 = vmul.f32 %v238, 0.6931472
        %v240 = vsub.f32 %v233, %v239
        %v241 = vrcp.pop %v237
        %v242 = vmul.f32 %v237, %v241
        %v243 = vsub.f32 1.0, %v242
        %v244 = vmul.f32 %v241, %v243
        %v245 = vadd.f32 %v241, %v244
        %vm246 = vweird.f32 %v237
        %vm247 = vweird.f32 %v241
        %vm248 = vmor %vm246, %vm247
        %v249 = vsel %vm248, %v241, %v245
        %v250 = vand.u32 2147483647, %v237
        %vm251 = vcmp.eq.f32.partialorder %v250, 8.507059e+37
        %v252 = vand.u32 %v237, 2147483648
        %v253 = vor.u32 1.1754944e-38, %v252
        %v254 = vsel %vm251, %v253, %v249
        %v255 = vmul.f32 %v235, %v254
        %v256 = vsub.f32 %v230, %v255
        %v257 = vsub.f32 %v240, %v215
        %v258 = vmul.f32 %v256, %v257
        %v259 = vsel %vm203, %v258, 0.0
        %v260 = vld [vmem:[#allocation2] sm:$0x1]
        %261 = vadd.xlane.f32.xlu0 %v259
        %v262 = vpop.xlane.xlu0 %261
        %v263 = vrot.slane %v262, 4
        %v264 = vadd.f32 %v262, %v263
        %v265 = vrot.slane %v264, 2
        %v266 = vadd.f32 %v264, %v265
        %v267 = vrot.slane %v266, 1
        %v268 = vadd.f32 %v266, %v267
        %s269 = vtos %v268
        %v270 = vstv %s269
        %v271 = vadd.f32 %v260, %v270
        %vm272 = vcmask 0
        %273 = vst.msk [vmem:[#allocation2] sm:$0x1] %vm272, %v271
        %p274 = scmp.eq.s32.totalorder %s20, 2
        // Predicated region
        $region41: #{jensen_shannon.1} parent=27 // pred_check
          %p275 = pneg %p274
        $region42: #{jensen_shannon.1} parent=27 // pred_check_branch
          %277 = sbr.rel (%p275) target = $region44
        $region43: #{jensen_shannon.1} parent=27 // pred_region
          %v278 = vld [vmem:[#allocation2] sm:$0x1]
          %v279 = vmul.f32 %v278, -0.025
          %280 = vst.msk [vmem:[#allocation8] sm:$0x1] %vm272, %v279
        $region44: #{jensen_shannon.1} parent=27 // pred_fallthru
          _
        // Predicated region
        $region45: #{jensen_shannon.1} parent=27 // pred_check
          %p281 = pneg %p85
        $region46: #{jensen_shannon.1} parent=27 // pred_check_branch
          %283 = sbr.rel (%p281) target = $region48
        $region47: #{jensen_shannon.1} parent=27 // pred_region
          %285 = vsyncadd [#allocation5], 0
          %s287 = sshll.u32 [#allocation8], 4
          %s288 = int_to_ptr.vmem [resolvable:$true] %s287
          %s289 = sshll.u32 %s2, 4
          %s290 = int_to_ptr.hbm [resolvable:$true] %s289
          %292 = dma.vmem_to_hbm [thread:$0]  %s288, 16, %s290, [#allocation5]
        $region48: #{jensen_shannon.1} parent=27 // pred_fallthru
          _
        // Predicated region
        $region49: #{jensen_shannon.1} parent=27 // pred_check
          %p293 = pneg %p85
        $region50: #{jensen_shannon.1} parent=27 // pred_check_branch
          %295 = sbr.rel (%p293) target = $region52
        $region51: #{jensen_shannon.1} parent=27 // pred_region
          %297 = dma.done [#allocation5], 16
        $region52: #{jensen_shannon.1} parent=27 // pred_fallthru
          _
      $region28: #{jensen_shannon.1} parent=5 // pred_fallthru
        _
      %p298 = scmp.le.s32.totalorder 2, %s15
      // Predicated region
      $region53: #{jensen_shannon.1} parent=5 // pred_check
        %p299 = pneg %p298
      $region54: #{jensen_shannon.1} parent=5 // pred_check_branch
        %301 = sbr.rel (%p299) target = $region56
      $region55: #{jensen_shannon.1} parent=5 // pred_region
        %s302 = ssub.s32 %s15, 2
      $region56: #{jensen_shannon.1} parent=5 // pred_fallthru
        _
    $region6: #{jensen_shannon.1} parent=1 // loop_footer
      %s19 = sadd.s32 1, %s15
    $region7: #{jensen_shannon.1} parent=1 // loop_footer_branch
      %14 = sbr.rel target = $region3
    $region8: #{jensen_shannon.1} parent=1 // loop_exit
      _
    %303 = vsyncpa [#allocation4], 1
    %s304 = scalar_lea.sflag [#allocation4], 1
    %305 = vsyncpa %s304, 1
    %306 = vsyncpa [#allocation7], 1
    %s307 = scalar_lea.sflag [#allocation7], 1
    %308 = vsyncpa %s307, 1
    %309 = vsyncpa [#allocation5], 1
    %s310 = scalar_lea.sflag [#allocation5], 1
    %311 = vsyncpa %s310, 1

</llo_original>
